<compile_context>
chip_gen: v5e
topology: v5e:2x2
jax: 0.10.0
libtpu: 0.0.40
codegen_flags: <defaults>
</compile_context>

<pallas_src>
import functools
import math

import numpy as np
import jax
import jax.numpy as jnp
from jax import lax
from jax.experimental import pallas as pl
from jax.experimental.pallas import tpu as pltpu


_VMEM_LIMIT = 32 * 1024 * 1024   # scoped VMEM request, safe on v5e/v6e/v7x


def _sigmoid(v):
    return 1.0 / (1.0 + jnp.exp(-v))


def _softplus(v):
    # matches torch.nn.functional.softplus (threshold=20)
    return jnp.where(v > 20.0, v, jnp.log(1.0 + jnp.exp(jnp.minimum(v, 20.0))))


def _rep(shape):
    """BlockSpec for a grid-replicated (untiled) operand on a 1-D grid."""
    zeros = tuple(0 for _ in shape)
    return pl.BlockSpec(shape, lambda b: zeros)


# ------------------------- kernel 1: fused pre-scan -------------------------

def _pre_scan_kernel(x_ref, wd_ref, bd_ref, wi_ref, wc_ref, bc_ref,
                     wx_ref, wdt_ref, bdt_ref,
                     dtsp_ref, du_ref, bt_ref, ct_ref, xc_ref, gz_ref):
    L = x_ref.shape[1]
    K = wc_ref.shape[0]
    C = bc_ref.shape[1]
    R = wdt_ref.shape[0]
    N = bt_ref.shape[1]

    x = x_ref[0]                                                        # (L, in_dim)
    # down_proj
    h = jnp.dot(x, wd_ref[...], preferred_element_type=jnp.float32) + bd_ref[...]
    # Mamba in_proj (no bias) -> split into x_in / z
    xz = jnp.dot(h, wi_ref[...], preferred_element_type=jnp.float32)    # (L, 2C)
    x_in = xz[:, :C]
    z = xz[:, C:]

    # causal depthwise conv, fully in registers/VMEM (no HBM padding round-trip)
    acc = x_in * wc_ref[K - 1:K, :]
    for s in range(1, K):
        shifted = jnp.concatenate(
            [jnp.zeros((s, C), jnp.float32), x_in[:L - s, :]], axis=0)   # row t = x_in[t-s]
        acc = acc + shifted * wc_ref[K - 1 - s:K - s, :]
    acc = acc + bc_ref[...]
    xc = acc * _sigmoid(acc)                                             # SiLU

    # x_proj (no bias) -> dt / B / C, then dt_proj
    x_dbl = jnp.dot(xc, wx_ref[...], preferred_element_type=jnp.float32)  # (L, R+2N)
    dt_raw = jnp.dot(x_dbl[:, :R], wdt_ref[...],
                     preferred_element_type=jnp.float32) + bdt_ref[...]
    dt_sp = _softplus(dt_raw)                                            # hoisted out of the scan

    dtsp_ref[0] = dt_sp.astype(dtsp_ref.dtype)
    du_ref[0] = (dt_sp * xc).astype(du_ref.dtype)                        # dt*u, hoisted
    bt_ref[0] = x_dbl[:, R:R + N].T.astype(bt_ref.dtype)                 # (N, L)
    ct_ref[0] = x_dbl[:, R + N:R + 2 * N].T.astype(ct_ref.dtype)         # (N, L)
    xc_ref[0] = xc.astype(xc_ref.dtype)
    gz_ref[0] = (z * _sigmoid(z)).astype(gz_ref.dtype)                   # silu(z), hoisted


def pre_scan(x, p):
    B, L, in_dim = x.shape
    bott, C = p['bott'], p['d_inner']
    N, R, K = p['d_state'], p['dt_rank'], p['d_conv']
    f32 = jnp.float32
    row = lambda b: (b, 0, 0)

    flops = 2 * B * L * (in_dim * bott + bott * 2 * C + C * (R + 2 * N) + R * C + C * K)
    bytes_accessed = 4 * (B * L * in_dim + 4 * B * L * C + 2 * B * N * L
                          + in_dim * bott + bott * 2 * C + K * C + C * (R + 2 * N)
                          + R * C + bott + 2 * C)

    return pl.pallas_call(
        _pre_scan_kernel,
        out_shape=(
            jax.ShapeDtypeStruct((B, L, C), f32),    # softplus(dt)
            jax.ShapeDtypeStruct((B, L, C), f32),    # dt * u
            jax.ShapeDtypeStruct((B, N, L), f32),    # B^T (state on sublanes, time on lanes)
            jax.ShapeDtypeStruct((B, N, L), f32),    # C^T
            jax.ShapeDtypeStruct((B, L, C), f32),    # u = conv+SiLU activations
            jax.ShapeDtypeStruct((B, L, C), f32),    # silu(z)
        ),
        grid=(B,),
        in_specs=[
            pl.BlockSpec((1, L, in_dim), row),
            _rep((in_dim, bott)), _rep((1, bott)),
            _rep((bott, 2 * C)),
            _rep((K, C)), _rep((1, C)),
            _rep((C, R + 2 * N)),
            _rep((R, C)), _rep((1, C)),
        ],
        out_specs=(
            pl.BlockSpec((1, L, C), row), pl.BlockSpec((1, L, C), row),
            pl.BlockSpec((1, N, L), row), pl.BlockSpec((1, N, L), row),
            pl.BlockSpec((1, L, C), row), pl.BlockSpec((1, L, C), row),
        ),
        compiler_params=pltpu.CompilerParams(
            dimension_semantics=("parallel",), vmem_limit_bytes=_VMEM_LIMIT),
        cost_estimate=pl.CostEstimate(flops=flops, transcendentals=4 * B * L * C,
                                      bytes_accessed=bytes_accessed),
    )(x, p['W_down'].T, p['b_down'].reshape(1, bott), p['W_in'].T,
      p['W_conv'], p['b_conv'].reshape(1, C),
      p['W_x'].T, p['W_dt'].T, p['b_dt'].reshape(1, C))


# ------------------------- kernel 2: selective scan -------------------------

def _scan_kernel(dtsp_ref, du_ref, bt_ref, ct_ref, a_ref, y_ref, h_ref, *, unroll):
    # blocks: dtsp/du/y (1, TL, C); bt/ct (1, N, TL); a (N, C); h scratch (N, C)
    @pl.when(pl.program_id(1) == 0)
    def _():
        h_ref[...] = jnp.zeros_like(h_ref)

    A = a_ref[...]                               # (N, C)
    TL = dtsp_ref.shape[1]
    n_groups = TL // unroll

    def group(g, h):
        base = pl.multiple_of(g * unroll, unroll)
        # One dense dynamic-sliced load per operand per group; every per-step
        # access below is a static slice of an in-register value.
        dt_g = dtsp_ref[0, pl.ds(base, unroll), :]          # (U, C)
        du_g = du_ref[0, pl.ds(base, unroll), :]            # (U, C)
        b_g = bt_ref[0, :, pl.ds(base, unroll)]             # (N, U)
        c_g = ct_ref[0, :, pl.ds(base, unroll)]             # (N, U)
        ys = []
        for t in range(unroll):                  # static unroll: LLO scheduler visibility
            # dA_t / x_t are independent of h -> hoistable off the recurrence
            # critical path within the unrolled group.
            dA_t = jnp.exp(dt_g[t:t + 1, :] * A)            # (N, C)  EUP
            x_t = b_g[:, t:t + 1] * du_g[t:t + 1, :]        # (N, C)  VPU outer product
            h = dA_t * h + x_t                              # (N, C)
            ys.append(jnp.sum(h * c_g[:, t:t + 1], axis=0, keepdims=True))   # (1, C)
        y_blk = ys[0] if unroll == 1 else jnp.concatenate(ys, axis=0)
        y_ref[0, pl.ds(base, unroll), :] = y_blk.astype(y_ref.dtype)   # dense (U, C) store
        return h

    h_ref[...] = lax.fori_loop(0, n_groups, group, h_ref[...])


def _pick_scan_chunk(l):
    # chunk of the time axis; must keep the lane dim of the (N, L) B/C blocks
    # 128-aligned (or equal to L).
    for tl in (512, 256, 128):
        if l % tl == 0:
            return tl
    return l


def selective_scan(dt_sp, du, Bt, Ct, A_t):
    B, L, C = dt_sp.shape
    N = Bt.shape[1]
    TL = _pick_scan_chunk(L)
    unroll = 8 if TL % 8 == 0 else 1

    return pl.pallas_call(
        functools.partial(_scan_kernel, unroll=unroll),
        out_shape=jax.ShapeDtypeStruct((B, L, C), jnp.float32),
        grid=(B, L // TL),
        in_specs=[
            pl.BlockSpec((1, TL, C), lambda b, j: (b, j, 0)),
            pl.BlockSpec((1, TL, C), lambda b, j: (b, j, 0)),
            pl.BlockSpec((1, N, TL), lambda b, j: (b, 0, j)),
            pl.BlockSpec((1, N, TL), lambda b, j: (b, 0, j)),
            pl.BlockSpec((N, C), lambda b, j: (0, 0)),
        ],
        out_specs=pl.BlockSpec((1, TL, C), lambda b, j: (b, j, 0)),
        scratch_shapes=[pltpu.VMEM((N, C), jnp.float32)],
        compiler_params=pltpu.CompilerParams(
            dimension_semantics=("parallel", "arbitrary"),
            vmem_limit_bytes=_VMEM_LIMIT),
        cost_estimate=pl.CostEstimate(flops=8 * B * L * N * C,
                                      transcendentals=B * L * N * C,
                                      bytes_accessed=4 * (3 * B * L * C + 2 * B * N * L + N * C)),
    )(dt_sp, du, Bt, Ct, A_t)


# ------------------------- kernel 3: fused post-scan -------------------------

def _post_scan_kernel(y_ref, xc_ref, gz_ref, d_ref, wo_ref, wu_ref, bu_ref, s_ref, o_ref):
    # (scan + D*u) * silu(z) -> out_proj -> up_proj -> * scaling
    y = (y_ref[...] + d_ref[...] * xc_ref[...]) * gz_ref[...]
    y = jnp.dot(y, wo_ref[...], preferred_element_type=jnp.float32)      # Mamba out_proj (no bias)
    out = jnp.dot(y, wu_ref[...], preferred_element_type=jnp.float32) + bu_ref[...]
    o_ref[...] = (out * s_ref[...]).astype(o_ref.dtype)


def _pick_row_tile(m):
    for tm in (512, 256, 128, 64, 32, 16, 8):
        if m % tm == 0 and m // tm >= 2:
            return tm
    return m


def post_scan(y_core, xc, gz, p):
    B, L, C = y_core.shape
    bott = p['bott']
    in_dim = p['W_up'].shape[0]
    M = B * L
    TM = _pick_row_tile(M)
    tile = lambda i: (i, 0)
    rep2 = lambda i: (0, 0)

    flops = 2 * M * (C * bott + bott * in_dim) + 4 * M * C
    bytes_accessed = 4 * (3 * M * C + 2 * M * in_dim + C * bott + bott * in_dim + in_dim + C + 1)

    out = pl.pallas_call(
        _post_scan_kernel,
        out_shape=jax.ShapeDtypeStruct((M, in_dim), jnp.float32),
        grid=(M // TM,),
        in_specs=[
            pl.BlockSpec((TM, C), tile), pl.BlockSpec((TM, C), tile), pl.BlockSpec((TM, C), tile),
            pl.BlockSpec((1, C), rep2),
            pl.BlockSpec((C, bott), rep2),
            pl.BlockSpec((bott, in_dim), rep2),
            pl.BlockSpec((1, in_dim), rep2),
            pl.BlockSpec((1, 1), rep2),
        ],
        out_specs=pl.BlockSpec((TM, in_dim), tile),
        compiler_params=pltpu.CompilerParams(
            dimension_semantics=("parallel",), vmem_limit_bytes=_VMEM_LIMIT),
        cost_estimate=pl.CostEstimate(flops=flops, transcendentals=0,
                                      bytes_accessed=bytes_accessed),
    )(y_core.reshape(M, C), xc.reshape(M, C), gz.reshape(M, C),
      p['D'].reshape(1, C), p['W_out'].T, p['W_up'].T,
      p['b_up'].reshape(1, in_dim), p['scaling'].reshape(1, 1))
    return out.reshape(B, L, in_dim)


# ------------------------- parameters & forward -------------------------

def init_params(key, in_dim, reduction_rate, mamba_config):
    bott = round(in_dim / reduction_rate)
    d_state = mamba_config['d_state']
    d_conv = mamba_config['d_conv']
    expand = mamba_config['expand']
    d_inner = int(expand * bott)
    dt_rank = math.ceil(bott / 16)
    ks = jax.random.split(key, 12)
    s = 0.1
    nrm = lambda k, shp: jax.random.normal(k, shp, jnp.float32) * s
    return dict(
        bott=bott, d_state=d_state, d_conv=d_conv, d_inner=d_inner, dt_rank=dt_rank,
        # down_proj / up_proj (PyTorch Linear weight layout (out, in))
        W_down=nrm(ks[0], (bott, in_dim)), b_down=nrm(ks[1], (bott,)),
        W_up=nrm(ks[9], (in_dim, bott)), b_up=nrm(ks[10], (in_dim,)),
        # Mamba: in_proj (no bias), depthwise conv (bias), x_proj (no bias), dt_proj (bias)
        W_in=nrm(ks[2], (2 * d_inner, bott)),
        W_conv=nrm(ks[3], (d_conv, d_inner)),   # tap-major, channels-last
        b_conv=nrm(ks[4], (d_inner,)),
        W_x=nrm(ks[5], (dt_rank + 2 * d_state, d_inner)),
        W_dt=nrm(ks[6], (d_inner, dt_rank)), b_dt=nrm(ks[7], (d_inner,)),
        A_log=jnp.log(jnp.broadcast_to(
            jnp.arange(1, d_state + 1, dtype=jnp.float32), (d_inner, d_state))),
        D=jnp.ones((d_inner,), jnp.float32),
        W_out=nrm(ks[8], (bott, d_inner)),
        # S4A learnable output scale (nn.Parameter(torch.ones(1)))
        scaling=jnp.ones((1,), jnp.float32),
    )


def mamba_adapter_forward(x, p):
    dt_sp, du, Bt, Ct, xc, gz = pre_scan(x, p)
    A_t = (-jnp.exp(p['A_log'])).T                       # (d_state, d_inner)
    y_core = selective_scan(dt_sp, du, Bt, Ct, A_t)      # (B, L, d_inner)
    return post_scan(y_core, xc, gz, p)                  # (B, L, in_dim)


# ------------------------- pure-JAX reference -------------------------

def reference_forward(x, p):
    B, L, _ = x.shape
    d_inner, d_state, d_conv, dt_rank = p['d_inner'], p['d_state'], p['d_conv'], p['dt_rank']
    silu = lambda v: v * _sigmoid(v)

    h = x @ p['W_down'].T + p['b_down']
    xz = h @ p['W_in'].T
    x_in, z = xz[..., :d_inner], xz[..., d_inner:]
    xp = jnp.pad(x_in, ((0, 0), (d_conv - 1, 0), (0, 0)))
    xc = sum(xp[:, k:k + L, :] * p['W_conv'][k] for k in range(d_conv)) + p['b_conv']
    xc = silu(xc)
    x_dbl = xc @ p['W_x'].T
    dt = _softplus(x_dbl[..., :dt_rank] @ p['W_dt'].T + p['b_dt'])
    Bp = x_dbl[..., dt_rank:dt_rank + d_state]
    Cp = x_dbl[..., dt_rank + d_state:]
    A = -jnp.exp(p['A_log'])                                                # (d_inner, d_state)
    hs = jnp.zeros((B, d_inner, d_state), jnp.float32)
    ys = []
    for t in range(L):
        dA = jnp.exp(dt[:, t, :, None] * A[None])
        hs = dA * hs + (dt[:, t, :, None] * xc[:, t, :, None]) * Bp[:, t, None, :]
        ys.append(jnp.sum(hs * Cp[:, t, None, :], axis=-1) + p['D'] * xc[:, t])
    y = jnp.stack(ys, axis=1) * silu(z)
    y = y @ p['W_out'].T
    out = y @ p['W_up'].T + p['b_up']
    return out * p['scaling']


if __name__ == "__main__":
    key = jax.random.PRNGKey(0)
    in_dim, reduction_rate = 32, 4
    mamba_config = {'d_state': 8, 'd_conv': 4, 'expand': 2}
    B, L = 2, 8

    kp, kx = jax.random.split(key)
    params = init_params(kp, in_dim, reduction_rate, mamba_config)
    x = jax.random.normal(kx, (B, L, in_dim), jnp.float32)

    out = jax.block_until_ready(mamba_adapter_forward(x, params))
    ref = reference_forward(x, params)

    assert out.shape == (B, L, in_dim)
    np.testing.assert_allclose(np.asarray(out), np.asarray(ref), atol=2e-4, rtol=2e-4)
    print("KERNEL_OK")
</pallas_src>

<mosaic_0001>
module attributes {stable_mosaic.version = 11 : i64} {
  func.func @_pre_scan_kernel(%arg0: i32, %arg1: memref<1x8x32xf32, #tpu.memory_space<vmem>>, %arg2: memref<32x8xf32, #tpu.memory_space<vmem>>, %arg3: memref<1x8xf32, #tpu.memory_space<vmem>>, %arg4: memref<8x32xf32, #tpu.memory_space<vmem>>, %arg5: memref<4x16xf32, #tpu.memory_space<vmem>>, %arg6: memref<1x16xf32, #tpu.memory_space<vmem>>, %arg7: memref<16x17xf32, #tpu.memory_space<vmem>>, %arg8: memref<1x16xf32, #tpu.memory_space<vmem>>, %arg9: memref<1x16xf32, #tpu.memory_space<vmem>>, %arg10: memref<1x8x16xf32, #tpu.memory_space<vmem>>, %arg11: memref<1x8x16xf32, #tpu.memory_space<vmem>>, %arg12: memref<1x8x8xf32, #tpu.memory_space<vmem>>, %arg13: memref<1x8x8xf32, #tpu.memory_space<vmem>>, %arg14: memref<1x8x16xf32, #tpu.memory_space<vmem>>, %arg15: memref<1x8x16xf32, #tpu.memory_space<vmem>>) attributes {dimension_semantics = [#tpu.dimension_semantics<parallel>], iteration_bounds = array<i64: 2>, scalar_prefetch = 0 : i64, scratch_operands = 0 : i64, tpu.core_type = #tpu.core_type<tc>, window_params = [{transform_indices = @transform_0, window_bounds = array<i64: 1, 8, 32>}, {pipeline_mode = #tpu.pipeline_mode<synchronous>, transform_indices = @transform_1, window_bounds = array<i64: 32, 8>}, {pipeline_mode = #tpu.pipeline_mode<synchronous>, transform_indices = @transform_2, window_bounds = array<i64: 1, 8>}, {pipeline_mode = #tpu.pipeline_mode<synchronous>, transform_indices = @transform_3, window_bounds = array<i64: 8, 32>}, {pipeline_mode = #tpu.pipeline_mode<synchronous>, transform_indices = @transform_4, window_bounds = array<i64: 4, 16>}, {pipeline_mode = #tpu.pipeline_mode<synchronous>, transform_indices = @transform_5, window_bounds = array<i64: 1, 16>}, {pipeline_mode = #tpu.pipeline_mode<synchronous>, transform_indices = @transform_6, window_bounds = array<i64: 16, 17>}, {pipeline_mode = #tpu.pipeline_mode<synchronous>, transform_indices = @transform_7, window_bounds = array<i64: 1, 16>}, {pipeline_mode = #tpu.pipeline_mode<synchronous>, transform_indices = @transform_8, window_bounds = array<i64: 1, 16>}, {transform_indices = @transform_9, window_bounds = array<i64: 1, 8, 16>}, {transform_indices = @transform_10, window_bounds = array<i64: 1, 8, 16>}, {transform_indices = @transform_11, window_bounds = array<i64: 1, 8, 8>}, {transform_indices = @transform_12, window_bounds = array<i64: 1, 8, 8>}, {transform_indices = @transform_13, window_bounds = array<i64: 1, 8, 16>}, {transform_indices = @transform_14, window_bounds = array<i64: 1, 8, 16>}]} {
    %c0 = arith.constant 0 : index
    %c0_0 = arith.constant 0 : index
    %c0_1 = arith.constant 0 : index
    %0 = vector.load %arg1[%c0, %c0_0, %c0_1] : memref<1x8x32xf32, #tpu.memory_space<vmem>>, vector<1x8x32xf32>
    %1 = vector.shape_cast %0 : vector<1x8x32xf32> to vector<8x32xf32>
    %c0_2 = arith.constant 0 : index
    %c0_3 = arith.constant 0 : index
    %2 = vector.load %arg2[%c0_2, %c0_3] : memref<32x8xf32, #tpu.memory_space<vmem>>, vector<32x8xf32>
    %cst = arith.constant dense<0.000000e+00> : vector<8x8xf32>
    %3 = tpu.matmul %1, %2, %cst {dimension_numbers = #tpu.dot_dimension_numbers<[1], [0], [0], [1], [0, 0, 1, 1], [], []>} : vector<8x32xf32>, vector<32x8xf32>, vector<8x8xf32> -> vector<8x8xf32>
    %c0_4 = arith.constant 0 : index
    %c0_5 = arith.constant 0 : index
    %4 = vector.load %arg3[%c0_4, %c0_5] : memref<1x8xf32, #tpu.memory_space<vmem>>, vector<1x8xf32>
    %5 = vector.broadcast %4 : vector<1x8xf32> to vector<8x8xf32>
    %6 = arith.addf %3, %5 : vector<8x8xf32>
    %c0_6 = arith.constant 0 : index
    %c0_7 = arith.constant 0 : index
    %7 = vector.load %arg4[%c0_6, %c0_7] : memref<8x32xf32, #tpu.memory_space<vmem>>, vector<8x32xf32>
    %cst_8 = arith.constant dense<0.000000e+00> : vector<8x32xf32>
    %8 = tpu.matmul %6, %7, %cst_8 {dimension_numbers = #tpu.dot_dimension_numbers<[1], [0], [0], [1], [0, 0, 1, 1], [], []>} : vector<8x8xf32>, vector<8x32xf32>, vector<8x32xf32> -> vector<8x32xf32>
    %9 = vector.extract_strided_slice %8 {offsets = [0, 0], sizes = [8, 16], strides = [1, 1]} : vector<8x32xf32> to vector<8x16xf32>
    %10 = vector.extract_strided_slice %8 {offsets = [0, 16], sizes = [8, 16], strides = [1, 1]} : vector<8x32xf32> to vector<8x16xf32>
    %c3 = arith.constant 3 : index
    %c0_9 = arith.constant 0 : index
    %11 = vector.load %arg5[%c3, %c0_9] : memref<4x16xf32, #tpu.memory_space<vmem>>, vector<1x16xf32>
    %12 = vector.broadcast %11 : vector<1x16xf32> to vector<8x16xf32>
    %13 = arith.mulf %9, %12 : vector<8x16xf32>
    %cst_10 = arith.constant 0.000000e+00 : f32
    %14 = vector.broadcast %cst_10 : f32 to vector<1x16xf32>
    %15 = vector.extract_strided_slice %9 {offsets = [0, 0], sizes = [7, 16], strides = [1, 1]} : vector<8x16xf32> to vector<7x16xf32>
    %16 = tpu.concatenate %14, %15 in 0 : vector<1x16xf32>, vector<7x16xf32> -> vector<8x16xf32>
    %c2 = arith.constant 2 : index
    %c0_11 = arith.constant 0 : index
    %17 = vector.load %arg5[%c2, %c0_11] : memref<4x16xf32, #tpu.memory_space<vmem>>, vector<1x16xf32>
    %18 = vector.broadcast %17 : vector<1x16xf32> to vector<8x16xf32>
    %19 = arith.mulf %16, %18 : vector<8x16xf32>
    %20 = arith.addf %13, %19 : vector<8x16xf32>
    %cst_12 = arith.constant 0.000000e+00 : f32
    %21 = vector.broadcast %cst_12 : f32 to vector<2x16xf32>
    %22 = vector.extract_strided_slice %9 {offsets = [0, 0], sizes = [6, 16], strides = [1, 1]} : vector<8x16xf32> to vector<6x16xf32>
    %23 = tpu.concatenate %21, %22 in 0 : vector<2x16xf32>, vector<6x16xf32> -> vector<8x16xf32>
    %c1 = arith.constant 1 : index
    %c0_13 = arith.constant 0 : index
    %24 = vector.load %arg5[%c1, %c0_13] : memref<4x16xf32, #tpu.memory_space<vmem>>, vector<1x16xf32>
    %25 = vector.broadcast %24 : vector<1x16xf32> to vector<8x16xf32>
    %26 = arith.mulf %23, %25 : vector<8x16xf32>
    %27 = arith.addf %20, %26 : vector<8x16xf32>
    %cst_14 = arith.constant 0.000000e+00 : f32
    %28 = vector.broadcast %cst_14 : f32 to vector<3x16xf32>
    %29 = vector.extract_strided_slice %9 {offsets = [0, 0], sizes = [5, 16], strides = [1, 1]} : vector<8x16xf32> to vector<5x16xf32>
    %30 = tpu.concatenate %28, %29 in 0 : vector<3x16xf32>, vector<5x16xf32> -> vector<8x16xf32>
    %c0_15 = arith.constant 0 : index
    %c0_16 = arith.constant 0 : index
    %31 = vector.load %arg5[%c0_15, %c0_16] : memref<4x16xf32, #tpu.memory_space<vmem>>, vector<1x16xf32>
    %32 = vector.broadcast %31 : vector<1x16xf32> to vector<8x16xf32>
    %33 = arith.mulf %30, %32 : vector<8x16xf32>
    %34 = arith.addf %27, %33 : vector<8x16xf32>
    %c0_17 = arith.constant 0 : index
    %c0_18 = arith.constant 0 : index
    %35 = vector.load %arg6[%c0_17, %c0_18] : memref<1x16xf32, #tpu.memory_space<vmem>>, vector<1x16xf32>
    %36 = vector.broadcast %35 : vector<1x16xf32> to vector<8x16xf32>
    %37 = arith.addf %34, %36 : vector<8x16xf32>
    %cst_19 = arith.constant 0.000000e+00 : f32
    %38 = vector.broadcast %cst_19 : f32 to vector<8x16xf32>
    %39 = arith.subf %38, %37 : vector<8x16xf32>
    %40 = math.exp %39 : vector<8x16xf32>
    %cst_20 = arith.constant 1.000000e+00 : f32
    %41 = vector.broadcast %cst_20 : f32 to vector<8x16xf32>
    %42 = arith.addf %41, %40 : vector<8x16xf32>
    %cst_21 = arith.constant 1.000000e+00 : f32
    %43 = vector.broadcast %cst_21 : f32 to vector<8x16xf32>
    %44 = arith.divf %43, %42 : vector<8x16xf32>
    %45 = arith.mulf %37, %44 : vector<8x16xf32>
    %c0_22 = arith.constant 0 : index
    %c0_23 = arith.constant 0 : index
    %46 = vector.load %arg7[%c0_22, %c0_23] : memref<16x17xf32, #tpu.memory_space<vmem>>, vector<16x17xf32>
    %cst_24 = arith.constant dense<0.000000e+00> : vector<8x17xf32>
    %47 = tpu.matmul %45, %46, %cst_24 {dimension_numbers = #tpu.dot_dimension_numbers<[1], [0], [0], [1], [0, 0, 1, 1], [], []>} : vector<8x16xf32>, vector<16x17xf32>, vector<8x17xf32> -> vector<8x17xf32>
    %48 = vector.extract_strided_slice %47 {offsets = [0, 0], sizes = [8, 1], strides = [1, 1]} : vector<8x17xf32> to vector<8x1xf32>
    %c0_25 = arith.constant 0 : index
    %c0_26 = arith.constant 0 : index
    %49 = vector.load %arg8[%c0_25, %c0_26] : memref<1x16xf32, #tpu.memory_space<vmem>>, vector<1x16xf32>
    %cst_27 = arith.constant dense<0.000000e+00> : vector<8x16xf32>
    %50 = tpu.matmul %48, %49, %cst_27 {dimension_numbers = #tpu.dot_dimension_numbers<[1], [0], [0], [1], [0, 0, 1, 1], [], []>} : vector<8x1xf32>, vector<1x16xf32>, vector<8x16xf32> -> vector<8x16xf32>
    %c0_28 = arith.constant 0 : index
    %c0_29 = arith.constant 0 : index
    %51 = vector.load %arg9[%c0_28, %c0_29] : memref<1x16xf32, #tpu.memory_space<vmem>>, vector<1x16xf32>
    %52 = vector.broadcast %51 : vector<1x16xf32> to vector<8x16xf32>
    %53 = arith.addf %50, %52 : vector<8x16xf32>
    %cst_30 = arith.constant 2.000000e+01 : f32
    %54 = vector.broadcast %cst_30 : f32 to vector<8x16xf32>
    %55 = arith.cmpf ogt, %53, %54 : vector<8x16xf32>
    %cst_31 = arith.constant 2.000000e+01 : f32
    %56 = vector.broadcast %cst_31 : f32 to vector<8x16xf32>
    %57 = arith.minimumf %53, %56 : vector<8x16xf32>
    %58 = math.exp %57 : vector<8x16xf32>
    %cst_32 = arith.constant 1.000000e+00 : f32
    %59 = vector.broadcast %cst_32 : f32 to vector<8x16xf32>
    %60 = arith.addf %59, %58 : vector<8x16xf32>
    %61 = math.log %60 : vector<8x16xf32>
    %62 = arith.select %55, %53, %61 : vector<8x16xi1>, vector<8x16xf32>
    %c0_33 = arith.constant 0 : index
    %c0_34 = arith.constant 0 : index
    %c0_35 = arith.constant 0 : index
    %63 = vector.load %arg10[%c0_33, %c0_34, %c0_35] : memref<1x8x16xf32, #tpu.memory_space<vmem>>, vector<1x8x16xf32>
    %64 = vector.shape_cast %63 : vector<1x8x16xf32> to vector<8x16xf32>
    %65 = vector.shape_cast %62 : vector<8x16xf32> to vector<1x8x16xf32>
    tpu.vector_store %arg10[%c0_33, %c0_34, %c0_35], %65 {strides = array<i32>} : memref<1x8x16xf32, #tpu.memory_space<vmem>>, vector<1x8x16xf32>,
    %66 = arith.mulf %62, %45 : vector<8x16xf32>
    %c0_36 = arith.constant 0 : index
    %c0_37 = arith.constant 0 : index
    %c0_38 = arith.constant 0 : index
    %67 = vector.load %arg11[%c0_36, %c0_37, %c0_38] : memref<1x8x16xf32, #tpu.memory_space<vmem>>, vector<1x8x16xf32>
    %68 = vector.shape_cast %67 : vector<1x8x16xf32> to vector<8x16xf32>
    %69 = vector.shape_cast %66 : vector<8x16xf32> to vector<1x8x16xf32>
    tpu.vector_store %arg11[%c0_36, %c0_37, %c0_38], %69 {strides = array<i32>} : memref<1x8x16xf32, #tpu.memory_space<vmem>>, vector<1x8x16xf32>,
    %70 = vector.extract_strided_slice %47 {offsets = [0, 1], sizes = [8, 8], strides = [1, 1]} : vector<8x17xf32> to vector<8x8xf32>
    %71 = tpu.transpose %70, [1, 0] : vector<8x8xf32> -> vector<8x8xf32>
    %c0_39 = arith.constant 0 : index
    %c0_40 = arith.constant 0 : index
    %c0_41 = arith.constant 0 : index
    %72 = vector.load %arg12[%c0_39, %c0_40, %c0_41] : memref<1x8x8xf32, #tpu.memory_space<vmem>>, vector<1x8x8xf32>
    %73 = vector.shape_cast %72 : vector<1x8x8xf32> to vector<8x8xf32>
    %74 = vector.shape_cast %71 : vector<8x8xf32> to vector<1x8x8xf32>
    tpu.vector_store %arg12[%c0_39, %c0_40, %c0_41], %74 {strides = array<i32>} : memref<1x8x8xf32, #tpu.memory_space<vmem>>, vector<1x8x8xf32>,
    %75 = vector.extract_strided_slice %47 {offsets = [0, 9], sizes = [8, 8], strides = [1, 1]} : vector<8x17xf32> to vector<8x8xf32>
    %76 = tpu.transpose %75, [1, 0] : vector<8x8xf32> -> vector<8x8xf32>
    %c0_42 = arith.constant 0 : index
    %c0_43 = arith.constant 0 : index
    %c0_44 = arith.constant 0 : index
    %77 = vector.load %arg13[%c0_42, %c0_43, %c0_44] : memref<1x8x8xf32, #tpu.memory_space<vmem>>, vector<1x8x8xf32>
    %78 = vector.shape_cast %77 : vector<1x8x8xf32> to vector<8x8xf32>
    %79 = vector.shape_cast %76 : vector<8x8xf32> to vector<1x8x8xf32>
    tpu.vector_store %arg13[%c0_42, %c0_43, %c0_44], %79 {strides = array<i32>} : memref<1x8x8xf32, #tpu.memory_space<vmem>>, vector<1x8x8xf32>,
    %c0_45 = arith.constant 0 : index
    %c0_46 = arith.constant 0 : index
    %c0_47 = arith.constant 0 : index
    %80 = vector.load %arg14[%c0_45, %c0_46, %c0_47] : memref<1x8x16xf32, #tpu.memory_space<vmem>>, vector<1x8x16xf32>
    %81 = vector.shape_cast %80 : vector<1x8x16xf32> to vector<8x16xf32>
    %82 = vector.shape_cast %45 : vector<8x16xf32> to vector<1x8x16xf32>
    tpu.vector_store %arg14[%c0_45, %c0_46, %c0_47], %82 {strides = array<i32>} : memref<1x8x16xf32, #tpu.memory_space<vmem>>, vector<1x8x16xf32>,
    %cst_48 = arith.constant 0.000000e+00 : f32
    %83 = vector.broadcast %cst_48 : f32 to vector<8x16xf32>
    %84 = arith.subf %83, %10 : vector<8x16xf32>
    %85 = math.exp %84 : vector<8x16xf32>
    %cst_49 = arith.constant 1.000000e+00 : f32
    %86 = vector.broadcast %cst_49 : f32 to vector<8x16xf32>
    %87 = arith.addf %86, %85 : vector<8x16xf32>
    %cst_50 = arith.constant 1.000000e+00 : f32
    %88 = vector.broadcast %cst_50 : f32 to vector<8x16xf32>
    %89 = arith.divf %88, %87 : vector<8x16xf32>
    %90 = arith.mulf %10, %89 : vector<8x16xf32>
    %c0_51 = arith.constant 0 : index
    %c0_52 = arith.constant 0 : index
    %c0_53 = arith.constant 0 : index
    %91 = vector.load %arg15[%c0_51, %c0_52, %c0_53] : memref<1x8x16xf32, #tpu.memory_space<vmem>>, vector<1x8x16xf32>
    %92 = vector.shape_cast %91 : vector<1x8x16xf32> to vector<8x16xf32>
    %93 = vector.shape_cast %90 : vector<8x16xf32> to vector<1x8x16xf32>
    tpu.vector_store %arg15[%c0_51, %c0_52, %c0_53], %93 {strides = array<i32>} : memref<1x8x16xf32, #tpu.memory_space<vmem>>, vector<1x8x16xf32>,
    return
  }
  func.func @transform_0(%arg0: i32) -> (i32, i32, i32) {
    %c0_i32 = arith.constant 0 : i32
    %c0_i32_0 = arith.constant 0 : i32
    %c0_i32_1 = arith.constant 0 : i32
    return %arg0, %c0_i32, %c0_i32_0 : i32, i32, i32
  }
  func.func @transform_1(%arg0: i32) -> (i32, i32) {
    %c0_i32 = arith.constant 0 : i32
    %c0_i32_0 = arith.constant 0 : i32
    %c0_i32_1 = arith.constant 0 : i32
    return %c0_i32, %c0_i32_0 : i32, i32
  }
  func.func @transform_2(%arg0: i32) -> (i32, i32) {
    %c0_i32 = arith.constant 0 : i32
    %c0_i32_0 = arith.constant 0 : i32
    %c0_i32_1 = arith.constant 0 : i32
    return %c0_i32, %c0_i32_0 : i32, i32
  }
  func.func @transform_3(%arg0: i32) -> (i32, i32) {
    %c0_i32 = arith.constant 0 : i32
    %c0_i32_0 = arith.constant 0 : i32
    %c0_i32_1 = arith.constant 0 : i32
    return %c0_i32, %c0_i32_0 : i32, i32
  }
  func.func @transform_4(%arg0: i32) -> (i32, i32) {
    %c0_i32 = arith.constant 0 : i32
    %c0_i32_0 = arith.constant 0 : i32
    %c0_i32_1 = arith.constant 0 : i32
    return %c0_i32, %c0_i32_0 : i32, i32
  }
  func.func @transform_5(%arg0: i32) -> (i32, i32) {
    %c0_i32 = arith.constant 0 : i32
    %c0_i32_0 = arith.constant 0 : i32
    %c0_i32_1 = arith.constant 0 : i32
    return %c0_i32, %c0_i32_0 : i32, i32
  }
  func.func @transform_6(%arg0: i32) -> (i32, i32) {
    %c0_i32 = arith.constant 0 : i32
    %c0_i32_0 = arith.constant 0 : i32
    %c0_i32_1 = arith.constant 0 : i32
    return %c0_i32, %c0_i32_0 : i32, i32
  }
  func.func @transform_7(%arg0: i32) -> (i32, i32) {
    %c0_i32 = arith.constant 0 : i32
    %c0_i32_0 = arith.constant 0 : i32
    %c0_i32_1 = arith.constant 0 : i32
    return %c0_i32, %c0_i32_0 : i32, i32
  }
  func.func @transform_8(%arg0: i32) -> (i32, i32) {
    %c0_i32 = arith.constant 0 : i32
    %c0_i32_0 = arith.constant 0 : i32
    %c0_i32_1 = arith.constant 0 : i32
    return %c0_i32, %c0_i32_0 : i32, i32
  }
  func.func @transform_9(%arg0: i32) -> (i32, i32, i32) {
    %c0_i32 = arith.constant 0 : i32
    %c0_i32_0 = arith.constant 0 : i32
    %c0_i32_1 = arith.constant 0 : i32
    return %arg0, %c0_i32, %c0_i32_0 : i32, i32, i32
  }
  func.func @transform_10(%arg0: i32) -> (i32, i32, i32) {
    %c0_i32 = arith.constant 0 : i32
    %c0_i32_0 = arith.constant 0 : i32
    %c0_i32_1 = arith.constant 0 : i32
    return %arg0, %c0_i32, %c0_i32_0 : i32, i32, i32
  }
  func.func @transform_11(%arg0: i32) -> (i32, i32, i32) {
    %c0_i32 = arith.constant 0 : i32
    %c0_i32_0 = arith.constant 0 : i32
    %c0_i32_1 = arith.constant 0 : i32
    return %arg0, %c0_i32, %c0_i32_0 : i32, i32, i32
  }
  func.func @transform_12(%arg0: i32) -> (i32, i32, i32) {
    %c0_i32 = arith.constant 0 : i32
    %c0_i32_0 = arith.constant 0 : i32
    %c0_i32_1 = arith.constant 0 : i32
    return %arg0, %c0_i32, %c0_i32_0 : i32, i32, i32
  }
  func.func @transform_13(%arg0: i32) -> (i32, i32, i32) {
    %c0_i32 = arith.constant 0 : i32
    %c0_i32_0 = arith.constant 0 : i32
    %c0_i32_1 = arith.constant 0 : i32
    return %arg0, %c0_i32, %c0_i32_0 : i32, i32, i32
  }
  func.func @transform_14(%arg0: i32) -> (i32, i32, i32) {
    %c0_i32 = arith.constant 0 : i32
    %c0_i32_0 = arith.constant 0 : i32
    %c0_i32_1 = arith.constant 0 : i32
    return %arg0, %c0_i32, %c0_i32_0 : i32, i32, i32
  }
}

</mosaic_0001>

<llo_original>
// kernel: tpu_custom_call.1
$region0: #{tpu_custom_call.1}
  #allocation0 [shape = 'u32[]', space=smem, size = 0x4, offset = 0x4, fixed_abs, tag = 'smem constant byte address 0x4 - core index']
  #allocation1 [shape = 'u32[72,128]{1,0:T(1,128)}', space=vmem, size = 0x9000, scoped, tag = 'internal scratch']
  %s0 = inlined_call_operand.vmem [shape: f32[2,8,32], index: 0, kind: input, shape index: {}]
  %s1 = inlined_call_operand.vmem [shape: f32[32,8], index: 1, kind: input, shape index: {}]
  %s2 = inlined_call_operand.vmem [shape: f32[1,8], index: 2, kind: input, shape index: {}]
  %s3 = inlined_call_operand.vmem [shape: f32[8,32], index: 3, kind: input, shape index: {}]
  %s4 = inlined_call_operand.hbm [shape: f32[4,16], index: 4, kind: input, shape index: {}]
  %s5 = inlined_call_operand.vmem [shape: f32[1,16], index: 5, kind: input, shape index: {}]
  %s6 = inlined_call_operand.vmem [shape: f32[16,17], index: 6, kind: input, shape index: {}]
  %s7 = inlined_call_operand.vmem [shape: f32[1,16], index: 7, kind: input, shape index: {}]
  %s8 = inlined_call_operand.vmem [shape: f32[1,16], index: 8, kind: input, shape index: {}]
  %s9 = inlined_call_operand.hbm [shape: f32[2,8,16], index: 9, kind: output, shape index: {0}]
  %s10 = inlined_call_operand.hbm [shape: f32[2,8,16], index: 10, kind: output, shape index: {1}]
  %s11 = inlined_call_operand.hbm [shape: f32[2,8,8], index: 11, kind: output, shape index: {2}]
  %s12 = inlined_call_operand.hbm [shape: f32[2,8,8], index: 12, kind: output, shape index: {3}]
  %s13 = inlined_call_operand.hbm [shape: f32[2,8,16], index: 13, kind: output, shape index: {4}]
  %s14 = inlined_call_operand.hbm [shape: f32[2,8,16], index: 14, kind: output, shape index: {5}]
  %15 = xla_tuple %s9, %s10, %s11, %s12, %s13, %s14
  %s16 = sld [smem:[#allocation0]]
  $region113: #{tpu_custom_call.1} parent=0
    _
  %s18 = ssub.s32 1, %s16
  %s19 = scalar_select 0, %s18, %s16
  $region1: #{tpu_custom_call.1} parent=0
    #allocation2 [shape = 'u8[2048]{0}', space=vmem, size = 0x800, scoped, tag = 'input window, operand 4, single buffered']
    #allocation3 [shape = 's32[2]{0}', space=sflag, size = 0x8, scoped, tag = 'scoped memory for tpu_custom_call.1']
    #allocation4 [shape = 's32[2]{0}', space=sflag, size = 0x8, scoped, tag = 'scoped memory for tpu_custom_call.1']
    #allocation5 [shape = 'u8[8192]{0}', space=vmem, size = 0x2000, scoped, tag = 'output window, operand 0']
    #allocation6 [shape = 'u8[8192]{0}', space=vmem, size = 0x2000, scoped, tag = 'output window, operand 1']
    #allocation7 [shape = 's32[2]{0}', space=sflag, size = 0x8, scoped, tag = 'scoped memory for tpu_custom_call.1']
    #allocation8 [shape = 'u8[8192]{0}', space=vmem, size = 0x2000, scoped, tag = 'output window, operand 2']
    #allocation9 [shape = 'u8[8192]{0}', space=vmem, size = 0x2000, scoped, tag = 'output window, operand 3']
    #allocation10 [shape = 's32[2]{0}', space=sflag, size = 0x8, scoped, tag = 'scoped memory for tpu_custom_call.1']
    #allocation11 [shape = 'u8[8192]{0}', space=vmem, size = 0x2000, scoped, tag = 'output window, operand 4']
    #allocation12 [shape = 'u8[8192]{0}', space=vmem, size = 0x2000, scoped, tag = 'output window, operand 5']
    #allocation13 [shape = 's32[2]{0}', space=sflag, size = 0x8, scoped, tag = 'scoped memory for tpu_custom_call.1']
    %20 = vsyncpa [#allocation3], 0
    %21 = vsyncpa [#allocation4], 0
    %s22 = scalar_lea.sflag [#allocation4], 1
    %23 = vsyncpa %s22, 0
    %24 = vsyncpa [#allocation7], 0
    %s25 = scalar_lea.sflag [#allocation7], 1
    %26 = vsyncpa %s25, 0
    %27 = vsyncpa [#allocation10], 0
    %s28 = scalar_lea.sflag [#allocation10], 1
    %29 = vsyncpa %s28, 0
    %30 = vsyncpa [#allocation13], 0
    %s31 = scalar_lea.sflag [#allocation13], 1
    %32 = vsyncpa %s31, 0
    loop: start=0, step=1, limit=4
    $region2: #{tpu_custom_call.1} parent=1 // loop_pre_header
      _
    $region3: #{tpu_custom_call.1} parent=1 // loop_header
      %s34 = sphi 0, %s38
      %p35 = scmp.ge.s32.totalorder %s34, 4
      %s44 = sphi 0, %s46
      %s47 = sphi 0, %s44
      %s48 = sphi 0, %s47
      %s64 = sphi 0, %s48
      %s68 = sphi 0, %s68
      %s70 = sphi 0, %s68
      %s71 = sphi 0, %s70
      %s85 = sphi 0, %s71
      %s89 = sphi 0, %s89
      %s91 = sphi 0, %s89
      %s92 = sphi 0, %s91
      %s106 = sphi 0, %s92
      %s110 = sphi 0, %s110
      %s112 = sphi 0, %s110
      %s113 = sphi 0, %s112
      %s127 = sphi 0, %s113
      %s131 = sphi 0, %s131
      %s133 = sphi 0, %s131
      %s134 = sphi 0, %s133
      %s148 = sphi 0, %s134
      %s152 = sphi 0, %s152
      %s154 = sphi 0, %s152
      %s155 = sphi 0, %s154
      %s169 = sphi 0, %s155
      %s173 = sphi 0, %s173
      %s175 = sphi 0, %s173
      %s176 = sphi 0, %s175
      %s190 = sphi 0, %s176
      %s194 = sphi 0, %s194
      %s196 = sphi 0, %s194
      %s197 = sphi 0, %s196
      %s211 = sphi 0, %s197
      %s215 = sphi 0, %s215
      %s217 = sphi 0, %s215
      %s218 = sphi 0, %s217
      %s232 = sphi 0, %s218
      %s238 = sphi 0, %s240
      %s241 = sphi 0, %s238
      %s242 = sphi 0, %s241
      %s258 = sphi 0, %s242
      %s264 = sphi 0, %s266
      %s267 = sphi 0, %s264
      %s268 = sphi 0, %s267
      %s284 = sphi 0, %s268
      %s290 = sphi 0, %s292
      %s293 = sphi 0, %s290
      %s294 = sphi 0, %s293
      %s310 = sphi 0, %s294
      %s316 = sphi 0, %s318
      %s319 = sphi 0, %s316
      %s320 = sphi 0, %s319
      %s336 = sphi 0, %s320
      %s342 = sphi 0, %s344
      %s345 = sphi 0, %s342
      %s346 = sphi 0, %s345
      %s362 = sphi 0, %s346
      %s368 = sphi 0, %s370
      %s371 = sphi 0, %s368
      %s372 = sphi 0, %s371
      %s388 = sphi 0, %s372
    $region4: #{tpu_custom_call.1} parent=1 // loop_header_branch
      %37 = sbr.rel (%p35) target = $region8
    $region5: #{tpu_custom_call.1} parent=1 // loop_body
      %s39 = ssub.s32 %s34, 1
      %s40 = ssub.s32 %s34, 2
      %s41 = sadd.s32 %s34, 1
      %s42 = ssub.s32 %s34, %s41
      %p43 = scmp.eq.s32.totalorder %s42, 0
      %s45 = sadd.s32 %s44, 1
      %s46 = scalar_select %p43, %s44, %s45
      %p49 = pneg %p43
      %p50 = scmp.eq.s32.totalorder %s34, 1
      %p51 = por %p49, %p50
      %p52 = scmp.ne.s32.totalorder %s44, %s47
      %p53 = scmp.eq.s32.totalorder %s34, 0
      %p54 = por %p52, %p53
      %p55 = scmp.ne.s32.totalorder %s44, %s47
      %p56 = scmp.eq.s32.totalorder %s39, 1
      %p57 = por %p55, %p56
      %p58 = scmp.ne.s32.totalorder %s47, %s48
      %p59 = scmp.eq.s32.totalorder %s39, 0
      %p60 = por %p58, %p59
      %p61 = scmp.ne.s32.totalorder %s47, %s48
      %p62 = scmp.eq.s32.totalorder %s40, 1
      %p63 = por %p61, %p62
      %p65 = scmp.ne.s32.totalorder %s48, %s64
      %p66 = scmp.eq.s32.totalorder %s40, 0
      %p67 = por %p65, %p66
      %s69 = sadd.s32 %s68, 1
      %p72 = scmp.eq.s32.totalorder %s34, 1
      %p73 = scmp.ne.s32.totalorder %s68, %s70
      %p74 = scmp.eq.s32.totalorder %s34, 0
      %p75 = por %p73, %p74
      %p76 = scmp.ne.s32.totalorder %s68, %s70
      %p77 = scmp.eq.s32.totalorder %s39, 1
      %p78 = por %p76, %p77
      %p79 = scmp.ne.s32.totalorder %s70, %s71
      %p80 = scmp.eq.s32.totalorder %s39, 0
      %p81 = por %p79, %p80
      %p82 = scmp.ne.s32.totalorder %s70, %s71
      %p83 = scmp.eq.s32.totalorder %s40, 1
      %p84 = por %p82, %p83
      %p86 = scmp.ne.s32.totalorder %s71, %s85
      %p87 = scmp.eq.s32.totalorder %s40, 0
      %p88 = por %p86, %p87
      %s90 = sadd.s32 %s89, 1
      %p93 = scmp.eq.s32.totalorder %s34, 1
      %p94 = scmp.ne.s32.totalorder %s89, %s91
      %p95 = scmp.eq.s32.totalorder %s34, 0
      %p96 = por %p94, %p95
      %p97 = scmp.ne.s32.totalorder %s89, %s91
      %p98 = scmp.eq.s32.totalorder %s39, 1
      %p99 = por %p97, %p98
      %p100 = scmp.ne.s32.totalorder %s91, %s92
      %p101 = scmp.eq.s32.totalorder %s39, 0
      %p102 = por %p100, %p101
      %p103 = scmp.ne.s32.totalorder %s91, %s92
      %p104 = scmp.eq.s32.totalorder %s40, 1
      %p105 = por %p103, %p104
      %p107 = scmp.ne.s32.totalorder %s92, %s106
      %p108 = scmp.eq.s32.totalorder %s40, 0
      %p109 = por %p107, %p108
      %s111 = sadd.s32 %s110, 1
      %p114 = scmp.eq.s32.totalorder %s34, 1
      %p115 = scmp.ne.s32.totalorder %s110, %s112
      %p116 = scmp.eq.s32.totalorder %s34, 0
      %p117 = por %p115, %p116
      %p118 = scmp.ne.s32.totalorder %s110, %s112
      %p119 = scmp.eq.s32.totalorder %s39, 1
      %p120 = por %p118, %p119
      %p121 = scmp.ne.s32.totalorder %s112, %s113
      %p122 = scmp.eq.s32.totalorder %s39, 0
      %p123 = por %p121, %p122
      %p124 = scmp.ne.s32.totalorder %s112, %s113
      %p125 = scmp.eq.s32.totalorder %s40, 1
      %p126 = por %p124, %p125
      %p128 = scmp.ne.s32.totalorder %s113, %s127
      %p129 = scmp.eq.s32.totalorder %s40, 0
      %p130 = por %p128, %p129
      %s132 = sadd.s32 %s131, 1
      %p135 = scmp.eq.s32.totalorder %s34, 1
      %p136 = scmp.ne.s32.totalorder %s131, %s133
      %p137 = scmp.eq.s32.totalorder %s34, 0
      %p138 = por %p136, %p137
      %p139 = scmp.ne.s32.totalorder %s131, %s133
      %p140 = scmp.eq.s32.totalorder %s39, 1
      %p141 = por %p139, %p140
      %p142 = scmp.ne.s32.totalorder %s133, %s134
      %p143 = scmp.eq.s32.totalorder %s39, 0
      %p144 = por %p142, %p143
      %p145 = scmp.ne.s32.totalorder %s133, %s134
      %p146 = scmp.eq.s32.totalorder %s40, 1
      %p147 = por %p145, %p146
      %p149 = scmp.ne.s32.totalorder %s134, %s148
      %p150 = scmp.eq.s32.totalorder %s40, 0
      %p151 = por %p149, %p150
      %s153 = sadd.s32 %s152, 1
      %p156 = scmp.eq.s32.totalorder %s34, 1
      %p157 = scmp.ne.s32.totalorder %s152, %s154
      %p158 = scmp.eq.s32.totalorder %s34, 0
      %p159 = por %p157, %p158
      %p160 = scmp.ne.s32.totalorder %s152, %s154
      %p161 = scmp.eq.s32.totalorder %s39, 1
      %p162 = por %p160, %p161
      %p163 = scmp.ne.s32.totalorder %s154, %s155
      %p164 = scmp.eq.s32.totalorder %s39, 0
      %p165 = por %p163, %p164
      %p166 = scmp.ne.s32.totalorder %s154, %s155
      %p167 = scmp.eq.s32.totalorder %s40, 1
      %p168 = por %p166, %p167
      %p170 = scmp.ne.s32.totalorder %s155, %s169
      %p171 = scmp.eq.s32.totalorder %s40, 0
      %p172 = por %p170, %p171
      %s174 = sadd.s32 %s173, 1
      %p177 = scmp.eq.s32.totalorder %s34, 1
      %p178 = scmp.ne.s32.totalorder %s173, %s175
      %p179 = scmp.eq.s32.totalorder %s34, 0
      %p180 = por %p178, %p179
      %p181 = scmp.ne.s32.totalorder %s173, %s175
      %p182 = scmp.eq.s32.totalorder %s39, 1
      %p183 = por %p181, %p182
      %p184 = scmp.ne.s32.totalorder %s175, %s176
      %p185 = scmp.eq.s32.totalorder %s39, 0
      %p186 = por %p184, %p185
      %p187 = scmp.ne.s32.totalorder %s175, %s176
      %p188 = scmp.eq.s32.totalorder %s40, 1
      %p189 = por %p187, %p188
      %p191 = scmp.ne.s32.totalorder %s176, %s190
      %p192 = scmp.eq.s32.totalorder %s40, 0
      %p193 = por %p191, %p192
      %s195 = sadd.s32 %s194, 1
      %p198 = scmp.eq.s32.totalorder %s34, 1
      %p199 = scmp.ne.s32.totalorder %s194, %s196
      %p200 = scmp.eq.s32.totalorder %s34, 0
      %p201 = por %p199, %p200
      %p202 = scmp.ne.s32.totalorder %s194, %s196
      %p203 = scmp.eq.s32.totalorder %s39, 1
      %p204 = por %p202, %p203
      %p205 = scmp.ne.s32.totalorder %s196, %s197
      %p206 = scmp.eq.s32.totalorder %s39, 0
      %p207 = por %p205, %p206
      %p208 = scmp.ne.s32.totalorder %s196, %s197
      %p209 = scmp.eq.s32.totalorder %s40, 1
      %p210 = por %p208, %p209
      %p212 = scmp.ne.s32.totalorder %s197, %s211
      %p213 = scmp.eq.s32.totalorder %s40, 0
      %p214 = por %p212, %p213
      %s216 = sadd.s32 %s215, 1
      %p219 = scmp.eq.s32.totalorder %s34, 1
      %p220 = scmp.ne.s32.totalorder %s215, %s217
      %p221 = scmp.eq.s32.totalorder %s34, 0
      %p222 = por %p220, %p221
      %p223 = scmp.ne.s32.totalorder %s215, %s217
      %p224 = scmp.eq.s32.totalorder %s39, 1
      %p225 = por %p223, %p224
      %p226 = scmp.ne.s32.totalorder %s217, %s218
      %p227 = scmp.eq.s32.totalorder %s39, 0
      %p228 = por %p226, %p227
      %p229 = scmp.ne.s32.totalorder %s217, %s218
      %p230 = scmp.eq.s32.totalorder %s40, 1
      %p231 = por %p229, %p230
      %p233 = scmp.ne.s32.totalorder %s218, %s232
      %p234 = scmp.eq.s32.totalorder %s40, 0
      %p235 = por %p233, %p234
      %s236 = ssub.s32 %s34, %s41
      %p237 = scmp.eq.s32.totalorder %s236, 0
      %s239 = sadd.s32 %s238, 1
      %s240 = scalar_select %p237, %s238, %s239
      %p243 = pneg %p237
      %p244 = scmp.eq.s32.totalorder %s34, 1
      %p245 = por %p243, %p244
      %p246 = scmp.ne.s32.totalorder %s238, %s241
      %p247 = scmp.eq.s32.totalorder %s34, 0
      %p248 = por %p246, %p247
      %p249 = scmp.ne.s32.totalorder %s238, %s241
      %p250 = scmp.eq.s32.totalorder %s39, 1
      %p251 = por %p249, %p250
      %p252 = scmp.ne.s32.totalorder %s241, %s242
      %p253 = scmp.eq.s32.totalorder %s39, 0
      %p254 = por %p252, %p253
      %p255 = scmp.ne.s32.totalorder %s241, %s242
      %p256 = scmp.eq.s32.totalorder %s40, 1
      %p257 = por %p255, %p256
      %p259 = scmp.ne.s32.totalorder %s242, %s258
      %p260 = scmp.eq.s32.totalorder %s40, 0
      %p261 = por %p259, %p260
      %s262 = ssub.s32 %s34, %s41
      %p263 = scmp.eq.s32.totalorder %s262, 0
      %s265 = sadd.s32 %s264, 1
      %s266 = scalar_select %p263, %s264, %s265
      %p269 = pneg %p263
      %p270 = scmp.eq.s32.totalorder %s34, 1
      %p271 = por %p269, %p270
      %p272 = scmp.ne.s32.totalorder %s264, %s267
      %p273 = scmp.eq.s32.totalorder %s34, 0
      %p274 = por %p272, %p273
      %p275 = scmp.ne.s32.totalorder %s264, %s267
      %p276 = scmp.eq.s32.totalorder %s39, 1
      %p277 = por %p275, %p276
      %p278 = scmp.ne.s32.totalorder %s267, %s268
      %p279 = scmp.eq.s32.totalorder %s39, 0
      %p280 = por %p278, %p279
      %p281 = scmp.ne.s32.totalorder %s267, %s268
      %p282 = scmp.eq.s32.totalorder %s40, 1
      %p283 = por %p281, %p282
      %p285 = scmp.ne.s32.totalorder %s268, %s284
      %p286 = scmp.eq.s32.totalorder %s40, 0
      %p287 = por %p285, %p286
      %s288 = ssub.s32 %s34, %s41
      %p289 = scmp.eq.s32.totalorder %s288, 0
      %s291 = sadd.s32 %s290, 1
      %s292 = scalar_select %p289, %s290, %s291
      %p295 = pneg %p289
      %p296 = scmp.eq.s32.totalorder %s34, 1
      %p297 = por %p295, %p296
      %p298 = scmp.ne.s32.totalorder %s290, %s293
      %p299 = scmp.eq.s32.totalorder %s34, 0
      %p300 = por %p298, %p299
      %p301 = scmp.ne.s32.totalorder %s290, %s293
      %p302 = scmp.eq.s32.totalorder %s39, 1
      %p303 = por %p301, %p302
      %p304 = scmp.ne.s32.totalorder %s293, %s294
      %p305 = scmp.eq.s32.totalorder %s39, 0
      %p306 = por %p304, %p305
      %p307 = scmp.ne.s32.totalorder %s293, %s294
      %p308 = scmp.eq.s32.totalorder %s40, 1
      %p309 = por %p307, %p308
      %p311 = scmp.ne.s32.totalorder %s294, %s310
      %p312 = scmp.eq.s32.totalorder %s40, 0
      %p313 = por %p311, %p312
      %s314 = ssub.s32 %s34, %s41
      %p315 = scmp.eq.s32.totalorder %s314, 0
      %s317 = sadd.s32 %s316, 1
      %s318 = scalar_select %p315, %s316, %s317
      %p321 = pneg %p315
      %p322 = scmp.eq.s32.totalorder %s34, 1
      %p323 = por %p321, %p322
      %p324 = scmp.ne.s32.totalorder %s316, %s319
      %p325 = scmp.eq.s32.totalorder %s34, 0
      %p326 = por %p324, %p325
      %p327 = scmp.ne.s32.totalorder %s316, %s319
      %p328 = scmp.eq.s32.totalorder %s39, 1
      %p329 = por %p327, %p328
      %p330 = scmp.ne.s32.totalorder %s319, %s320
      %p331 = scmp.eq.s32.totalorder %s39, 0
      %p332 = por %p330, %p331
      %p333 = scmp.ne.s32.totalorder %s319, %s320
      %p334 = scmp.eq.s32.totalorder %s40, 1
      %p335 = por %p333, %p334
      %p337 = scmp.ne.s32.totalorder %s320, %s336
      %p338 = scmp.eq.s32.totalorder %s40, 0
      %p339 = por %p337, %p338
      %s340 = ssub.s32 %s34, %s41
      %p341 = scmp.eq.s32.totalorder %s340, 0
      %s343 = sadd.s32 %s342, 1
      %s344 = scalar_select %p341, %s342, %s343
      %p347 = pneg %p341
      %p348 = scmp.eq.s32.totalorder %s34, 1
      %p349 = por %p347, %p348
      %p350 = scmp.ne.s32.totalorder %s342, %s345
      %p351 = scmp.eq.s32.totalorder %s34, 0
      %p352 = por %p350, %p351
      %p353 = scmp.ne.s32.totalorder %s342, %s345
      %p354 = scmp.eq.s32.totalorder %s39, 1
      %p355 = por %p353, %p354
      %p356 = scmp.ne.s32.totalorder %s345, %s346
      %p357 = scmp.eq.s32.totalorder %s39, 0
      %p358 = por %p356, %p357
      %p359 = scmp.ne.s32.totalorder %s345, %s346
      %p360 = scmp.eq.s32.totalorder %s40, 1
      %p361 = por %p359, %p360
      %p363 = scmp.ne.s32.totalorder %s346, %s362
      %p364 = scmp.eq.s32.totalorder %s40, 0
      %p365 = por %p363, %p364
      %s366 = ssub.s32 %s34, %s41
      %p367 = scmp.eq.s32.totalorder %s366, 0
      %s369 = sadd.s32 %s368, 1
      %s370 = scalar_select %p367, %s368, %s369
      %p373 = pneg %p367
      %p374 = scmp.eq.s32.totalorder %s34, 1
      %p375 = por %p373, %p374
      %p376 = scmp.ne.s32.totalorder %s368, %s371
      %p377 = scmp.eq.s32.totalorder %s34, 0
      %p378 = por %p376, %p377
      %p379 = scmp.ne.s32.totalorder %s368, %s371
      %p380 = scmp.eq.s32.totalorder %s39, 1
      %p381 = por %p379, %p380
      %p382 = scmp.ne.s32.totalorder %s371, %s372
      %p383 = scmp.eq.s32.totalorder %s39, 0
      %p384 = por %p382, %p383
      %p385 = scmp.ne.s32.totalorder %s371, %s372
      %p386 = scmp.eq.s32.totalorder %s40, 1
      %p387 = por %p385, %p386
      %p389 = scmp.ne.s32.totalorder %s372, %s388
      %p390 = scmp.eq.s32.totalorder %s40, 0
      %p391 = por %p389, %p390
      %p392 = scmp.le.s32.totalorder 1, %s34
      %p393 = scmp.lt.s32.totalorder %s34, 3
      %p394 = pnand %p392, %p393
      %p395 = pneg %p394
      // Predicated region
      $region9: #{tpu_custom_call.1} parent=5 // pred_check
        _
      $region10: #{tpu_custom_call.1} parent=5 // pred_check_branch
        %397 = sbr.rel (%p394) target = $region12
      $region11: #{tpu_custom_call.1} parent=5 // pred_region
        %s398 = ssub.s32 %s34, 1
        // Predicated region
        $region13: #{tpu_custom_call.1} parent=11 // pred_check
          %p399 = pneg %p81
        $region14: #{tpu_custom_call.1} parent=11 // pred_check_branch
          %401 = sbr.rel (%p399) target = $region16
        $region15: #{tpu_custom_call.1} parent=11 // pred_region
          _
        $region16: #{tpu_custom_call.1} parent=11 // pred_fallthru
          _
        // Predicated region
        $region17: #{tpu_custom_call.1} parent=11 // pred_check
          %p402 = pneg %p102
        $region18: #{tpu_custom_call.1} parent=11 // pred_check_branch
          %404 = sbr.rel (%p402) target = $region20
        $region19: #{tpu_custom_call.1} parent=11 // pred_region
          _
        $region20: #{tpu_custom_call.1} parent=11 // pred_fallthru
          _
        // Predicated region
        $region21: #{tpu_custom_call.1} parent=11 // pred_check
          %p405 = pneg %p123
        $region22: #{tpu_custom_call.1} parent=11 // pred_check_branch
          %407 = sbr.rel (%p405) target = $region24
        $region23: #{tpu_custom_call.1} parent=11 // pred_region
          _
        $region24: #{tpu_custom_call.1} parent=11 // pred_fallthru
          _
        // Predicated region
        $region25: #{tpu_custom_call.1} parent=11 // pred_check
          %p408 = pneg %p144
        $region26: #{tpu_custom_call.1} parent=11 // pred_check_branch
          %410 = sbr.rel (%p408) target = $region28
        $region27: #{tpu_custom_call.1} parent=11 // pred_region
          %412 = vsyncadd [#allocation3], 0
          %s414 = sshll.u32 %s4, 4
          %s415 = int_to_ptr.hbm [resolvable:$true] %s414
          %s416 = sshll.u32 [#allocation2], 4
          %s417 = int_to_ptr.vmem [resolvable:$true] %s416
          %419 = dma.hbm_to_vmem [thread:$0]  %s415, 64, %s417, [#allocation3]
        $region28: #{tpu_custom_call.1} parent=11 // pred_fallthru
          _
        // Predicated region
        $region29: #{tpu_custom_call.1} parent=11 // pred_check
          %p420 = pneg %p165
        $region30: #{tpu_custom_call.1} parent=11 // pred_check_branch
          %422 = sbr.rel (%p420) target = $region32
        $region31: #{tpu_custom_call.1} parent=11 // pred_region
          _
        $region32: #{tpu_custom_call.1} parent=11 // pred_fallthru
          _
        // Predicated region
        $region33: #{tpu_custom_call.1} parent=11 // pred_check
          %p423 = pneg %p186
        $region34: #{tpu_custom_call.1} parent=11 // pred_check_branch
          %425 = sbr.rel (%p423) target = $region36
        $region35: #{tpu_custom_call.1} parent=11 // pred_region
          _
        $region36: #{tpu_custom_call.1} parent=11 // pred_fallthru
          _
        // Predicated region
        $region37: #{tpu_custom_call.1} parent=11 // pred_check
          %p426 = pneg %p207
        $region38: #{tpu_custom_call.1} parent=11 // pred_check_branch
          %428 = sbr.rel (%p426) target = $region40
        $region39: #{tpu_custom_call.1} parent=11 // pred_region
          _
        $region40: #{tpu_custom_call.1} parent=11 // pred_fallthru
          _
        // Predicated region
        $region41: #{tpu_custom_call.1} parent=11 // pred_check
          %p429 = pneg %p228
        $region42: #{tpu_custom_call.1} parent=11 // pred_check_branch
          %431 = sbr.rel (%p429) target = $region44
        $region43: #{tpu_custom_call.1} parent=11 // pred_region
          _
        $region44: #{tpu_custom_call.1} parent=11 // pred_fallthru
          _
      $region12: #{tpu_custom_call.1} parent=5 // pred_fallthru
        _
      %p432 = scmp.lt.s32.totalorder %s34, 2
      // Predicated region
      $region45: #{tpu_custom_call.1} parent=5 // pred_check
        %p433 = pneg %p432
      $region46: #{tpu_custom_call.1} parent=5 // pred_check_branch
        %435 = sbr.rel (%p433) target = $region48
      $region47: #{tpu_custom_call.1} parent=5 // pred_region
        // Predicated region
        $region49: #{tpu_custom_call.1} parent=47 // pred_check
          %p436 = pneg %p54
        $region50: #{tpu_custom_call.1} parent=47 // pred_check_branch
          %438 = sbr.rel (%p436) target = $region52
        $region51: #{tpu_custom_call.1} parent=47 // pred_region
          %p439 = scmp.lt.s32.totalorder %s34, 1
          %s440 = scalar_select %p439, %s34, 1
          %s441 = smul.addr %s440, 8
          %s442 = scalar_lea.vmem %s0, %s441
        $region52: #{tpu_custom_call.1} parent=47 // pred_fallthru
          _
      $region48: #{tpu_custom_call.1} parent=5 // pred_fallthru
        _
      %p443 = scmp.le.s32.totalorder 1, %s34
      %p444 = scmp.lt.s32.totalorder %s34, 3
      %p445 = pnand %p443, %p444
      %p446 = pneg %p445
      // Predicated region
      $region53: #{tpu_custom_call.1} parent=5 // pred_check
        _
      $region54: #{tpu_custom_call.1} parent=5 // pred_check_branch
        %448 = sbr.rel (%p445) target = $region56
      $region55: #{tpu_custom_call.1} parent=5 // pred_region
        %s449 = ssub.s32 %s34, 1
        // Predicated region
        $region57: #{tpu_custom_call.1} parent=55 // pred_check
          %p450 = pneg %p144
        $region58: #{tpu_custom_call.1} parent=55 // pred_check_branch
          %452 = sbr.rel (%p450) target = $region60
        $region59: #{tpu_custom_call.1} parent=55 // pred_region
          %454 = dma.done [#allocation3], 64
        $region60: #{tpu_custom_call.1} parent=55 // pred_fallthru
          _
        %p455 = scmp.lt.s32.totalorder %s39, 1
        %s456 = scalar_select %p455, %s39, 1
        %s457 = smul.addr %s456, 8
        %s458 = scalar_lea.vmem %s0, %s457
        %p459 = pneg %p60
        %p460 = pneg %p57
        %p461 = pneg %p81
        %p462 = pneg %p78
        %p463 = pneg %p102
        %p464 = pneg %p99
        %p465 = pneg %p123
        %p466 = pneg %p120
        %p467 = pneg %p144
        %p468 = pneg %p141
        %p469 = pneg %p165
        %p470 = pneg %p162
        %p471 = pneg %p186
        %p472 = pneg %p183
        %p473 = pneg %p207
        %p474 = pneg %p204
        %p475 = pneg %p228
        %p476 = pneg %p225
        %p477 = pneg %p254
        %p478 = pneg %p251
        %s479 = sand.u32 %s241, 1
        %s480 = scalar_lea.sflag [#allocation4], %s479
        %s481 = sand.u32 %s241, 1
        %s482 = smul.addr %s481, 8
        %s483 = scalar_lea.vmem [#allocation5], %s482
        %p484 = pneg %p280
        %p485 = pneg %p277
        %s486 = sand.u32 %s39, 1
        %s487 = scalar_lea.sflag [#allocation7], %s486
        %s488 = sand.u32 %s267, 1
        %s489 = smul.addr %s488, 8
        %s490 = scalar_lea.vmem [#allocation6], %s489
        %p491 = pneg %p306
        %p492 = pneg %p303
        %s493 = sand.u32 %s39, 1
        %s494 = scalar_lea.sflag [#allocation7], %s493
        %s495 = sand.u32 %s293, 1
        %s496 = smul.addr %s495, 8
        %s497 = scalar_lea.vmem [#allocation8], %s496
        %p498 = pneg %p332
        %p499 = pneg %p329
        %s500 = sand.u32 %s39, 1
        %s501 = scalar_lea.sflag [#allocation10], %s500
        %s502 = sand.u32 %s319, 1
        %s503 = smul.addr %s502, 8
        %s504 = scalar_lea.vmem [#allocation9], %s503
        %p505 = pneg %p358
        %p506 = pneg %p355
        %s507 = sand.u32 %s39, 1
        %s508 = scalar_lea.sflag [#allocation10], %s507
        %s509 = sand.u32 %s345, 1
        %s510 = smul.addr %s509, 8
        %s511 = scalar_lea.vmem [#allocation11], %s510
        %p512 = pneg %p384
        %p513 = pneg %p381
        %s514 = sand.u32 %s371, 1
        %s515 = scalar_lea.sflag [#allocation13], %s514
        %s516 = sand.u32 %s371, 1
        %s517 = smul.addr %s516, 8
        %s518 = scalar_lea.vmem [#allocation12], %s517
        %p519 = scmp.lt.s32.totalorder %s39, 1
        %s520 = scalar_select %p519, %s39, 1
        %s521 = smul.addr %s520, 8
        %s522 = scalar_lea.vmem %s0, %s521
        %v523 = vld [vmem:[%s522] sm:$0xff]
        %v524 = vld [vmem:[%s1] sm:$0xff]
        %v525 = vld [vmem:[%s1 + $0x8] sm:$0xff]
        %v526 = vld [vmem:[%s1 + $0x10] sm:$0xff]
        %v527 = vld [vmem:[%s1 + $0x18] sm:$0xff]
        %v528 = vld [vmem:[%s2] sm:$0x1]
        %v530 = vperm.slane %v528, 0
        %vm532 = vcmask 261120
        %v534 = vsel %vm532, %v523, 0
        %536 = vmatpush.msra.mxu0 0.0
        %537 = vmatpush.msra.mxu0 0.0
        %538 = vmatpush.msra.mxu0 0.0
        %539 = vmatpush.msra.mxu0 0.0
        %540 = vmatpush.msra.mxu0 0.0
        %541 = vmatpush.msra.mxu0 0.0
        %542 = vmatpush.msra.mxu0 0.0
        %543 = vmatpush.msra.mxu0 0.0
        %544 = vmatpush.msra.mxu0 0.0
        %545 = vmatpush.msra.mxu0 0.0
        %546 = vmatpush.msra.mxu0 0.0
        %547 = vmatpush.msra.mxu0 0.0
        %548 = vmatpush.msra.mxu0 %v527
        %549 = vmatpush.msra.mxu0 %v526
        %550 = vmatpush.msra.mxu0 %v525
        %551 = vmatpush.msra.mxu0 %v524
        %552 = vmatmul.f32.gmra.mxu0 %v534
        %v553 = vpop.f32.mrf.mxu0
        %v554 = vadd.f32 %v530, %v553
        %555 = vdwg.mxu0
        %v556 = vld [vmem:[%s3] sm:$0xff]
        %vm557 = vcmask 64512
        %v559 = vsel %vm557, %v554, 0
        %561 = vmatpush.msra.mxu0 0.0
        %562 = vmatpush.msra.mxu0 0.0
        %563 = vmatpush.msra.mxu0 0.0
        %564 = vmatpush.msra.mxu0 0.0
        %565 = vmatpush.msra.mxu0 0.0
        %566 = vmatpush.msra.mxu0 0.0
        %567 = vmatpush.msra.mxu0 0.0
        %568 = vmatpush.msra.mxu0 0.0
        %569 = vmatpush.msra.mxu0 0.0
        %570 = vmatpush.msra.mxu0 0.0
        %571 = vmatpush.msra.mxu0 0.0
        %572 = vmatpush.msra.mxu0 0.0
        %573 = vmatpush.msra.mxu0 0.0
        %574 = vmatpush.msra.mxu0 0.0
        %575 = vmatpush.msra.mxu0 0.0
        %576 = vmatpush.msra.mxu0 %v556
        %577 = vmatmul.f32.gmra.mxu0 %v559
        %v578 = vpop.f32.mrf.mxu0
        %v579 = vadd.f32 0.0, %v578
        %580 = vdwg.mxu0
        %v581 = vld [vmem:[#allocation2 + $0x3] sm:$0x1]
        %v582 = vperm.slane %v581, 0
        %v583 = vmul.f32 %v579, %v582
        %v585 = vrot.slane %v579, 7
        %vm587 = vcmask 1040384
        %v588 = vsel %vm587, 0.0, %v585
        %v589 = vld [vmem:[#allocation2 + $0x2] sm:$0x1]
        %v590 = vperm.slane %v589, 0
        %v591 = vmul.f32 %v588, %v590
        %v592 = vadd.f32 %v583, %v591
        %v593 = vrot.slane %v579, 6
        %vm595 = vcmask 1041408
        %v596 = vsel %vm595, 0.0, %v593
        %v597 = vld [vmem:[#allocation2 + $0x1] sm:$0x1]
        %v598 = vperm.slane %v597, 0
        %v599 = vmul.f32 %v596, %v598
        %v600 = vadd.f32 %v592, %v599
        %v601 = vrot.slane %v579, 5
        %vm603 = vcmask 1042432
        %v604 = vsel %vm603, 0.0, %v601
        %v605 = vld [vmem:[#allocation2] sm:$0x1]
        %v606 = vperm.slane %v605, 0
        %v607 = vmul.f32 %v604, %v606
        %v608 = vadd.f32 %v600, %v607
        %v609 = vld [vmem:[%s5] sm:$0x1]
        %v611 = vperm.slane %v609, 0
        %v613 = vadd.f32 %v608, %v611
        %v614 = vsub.f32 0.0, %v613
        %v615 = vmul.f32 %v614, 1.442695
        %v616 = vpow.pop %v615
        %v617 = vadd.f32 %v616, 1.0
        %v618 = vrcp.pop %v617
        %v619 = vmul.f32 %v617, %v618
        %v620 = vsub.f32 1.0, %v619
        %v621 = vmul.f32 %v618, %v620
        %v622 = vadd.f32 %v618, %v621
        %vm623 = vweird.f32 %v617
        %vm624 = vweird.f32 %v618
        %vm625 = vmor %vm623, %vm624
        %v626 = vsel %vm625, %v618, %v622
        %v627 = vand.u32 2147483647, %v617
        %vm628 = vcmp.eq.f32.partialorder %v627, 8.507059e+37
        %v629 = vand.u32 %v617, 2147483648
        %v630 = vor.u32 1.1754944e-38, %v629
        %v631 = vsel %vm628, %v630, %v626
        %v632 = vmul.f32 1.0, %v631
        %v633 = vmul.f32 %v613, %v632
        %v634 = vld [vmem:[%s6] sm:$0xff]
        %v635 = vld [vmem:[%s6 + $0x8] sm:$0xff]
        %vm636 = vcmask 130048
        %v638 = vsel %vm636, %v633, 0
        %640 = vmatpush.msra.mxu0 0.0
        %641 = vmatpush.msra.mxu0 0.0
        %642 = vmatpush.msra.mxu0 0.0
        %643 = vmatpush.msra.mxu0 0.0
        %644 = vmatpush.msra.mxu0 0.0
        %645 = vmatpush.msra.mxu0 0.0
        %646 = vmatpush.msra.mxu0 0.0
        %647 = vmatpush.msra.mxu0 0.0
        %648 = vmatpush.msra.mxu0 0.0
        %649 = vmatpush.msra.mxu0 0.0
        %650 = vmatpush.msra.mxu0 0.0
        %651 = vmatpush.msra.mxu0 0.0
        %652 = vmatpush.msra.mxu0 0.0
        %653 = vmatpush.msra.mxu0 0.0
        %654 = vmatpush.msra.mxu0 %v635
        %655 = vmatpush.msra.mxu0 %v634
        %656 = vmatmul.f32.gmra.mxu0 %v638
        %v657 = vpop.f32.mrf.mxu0
        %v658 = vadd.f32 0.0, %v657
        %659 = vdwg.mxu0
        %v660 = vld [vmem:[%s7] sm:$0x1]
        %v661 = vld [vmem:[%s8] sm:$0x1]
        %v663 = vperm.slane %v661, 0
        %vm665 = vcmask 7168
        %v667 = vsel %vm665, %v658, 0
        %v670 = vsel %vm587, %v660, 0
        %672 = vmatpush.msra.mxu0 0.0
        %673 = vmatpush.msra.mxu0 0.0
        %674 = vmatpush.msra.mxu0 0.0
        %675 = vmatpush.msra.mxu0 0.0
        %676 = vmatpush.msra.mxu0 0.0
        %677 = vmatpush.msra.mxu0 0.0
        %678 = vmatpush.msra.mxu0 0.0
        %679 = vmatpush.msra.mxu0 0.0
        %680 = vmatpush.msra.mxu0 0.0
        %681 = vmatpush.msra.mxu0 0.0
        %682 = vmatpush.msra.mxu0 0.0
        %683 = vmatpush.msra.mxu0 0.0
        %684 = vmatpush.msra.mxu0 0.0
        %685 = vmatpush.msra.mxu0 0.0
        %686 = vmatpush.msra.mxu0 0.0
        %687 = vmatpush.msra.mxu0 %v670
        %688 = vmatmul.f32.gmra.mxu0 %v667
        %v689 = vpop.f32.mrf.mxu0
        %v690 = vadd.f32 %v663, %v689
        %691 = vdwg.mxu0
        %vm692 = vcmp.gt.f32.partialorder %v690, 20.0
        %v693 = vmin.f32 %v690, 20.0
        %v694 = vmul.f32 %v693, 1.442695
        %v695 = vpow.pop %v694
        %v696 = vadd.f32 %v695, 1.0
        %v697 = vlog2.pop %v696
        %v698 = vmul.f32 %v697, 0.6931472
        %v699 = vsel %vm692, %v690, %v698
        %700 = vst.msk [vmem:[%s483] sm:$0xff] %vm636, %v699
        %v701 = vmul.f32 %v699, %v633
        %702 = vst.msk [vmem:[%s490] sm:$0xff] %vm636, %v701
        %703 = vrot.lane.b32.xlu0 %v658, 127
        %v704 = vpop.permute.xlu0 %703
        %706 = vxpose.xlu0.b32.start [1/16] %v704, 128
        %707 = vxpose.xlu0.b32.cont [2/16] 0.0, 128
        %708 = vxpose.xlu0.b32.cont [3/16] 0.0, 128
        %709 = vxpose.xlu0.b32.cont [4/16] 0.0, 128
        %710 = vxpose.xlu0.b32.cont [5/16] 0.0, 128
        %711 = vxpose.xlu0.b32.cont [6/16] 0.0, 128
        %712 = vxpose.xlu0.b32.cont [7/16] 0.0, 128
        %713 = vxpose.xlu0.b32.cont [8/16] 0.0, 128
        %714 = vxpose.xlu0.b32.cont [9/16] 0.0, 128
        %715 = vxpose.xlu0.b32.cont [10/16] 0.0, 128
        %716 = vxpose.xlu0.b32.cont [11/16] 0.0, 128
        %717 = vxpose.xlu0.b32.cont [12/16] 0.0, 128
        %718 = vxpose.xlu0.b32.cont [13/16] 0.0, 128
        %719 = vxpose.xlu0.b32.cont [14/16] 0.0, 128
        %720 = vxpose.xlu0.b32.cont [15/16] 0.0, 128
        %721 = vxpose.xlu0.b32.end [16/16] 0.0, 128
        %v722 = vpop.trf.xlu0
        %v723 = vpop.trf.xlu0
        %v724 = vpop.trf.xlu0
        %v725 = vpop.trf.xlu0
        %v726 = vpop.trf.xlu0
        %v727 = vpop.trf.xlu0
        %v728 = vpop.trf.xlu0
        %v729 = vpop.trf.xlu0
        %v730 = vpop.trf.xlu0
        %v731 = vpop.trf.xlu0
        %v732 = vpop.trf.xlu0
        %v733 = vpop.trf.xlu0
        %v734 = vpop.trf.xlu0
        %v735 = vpop.trf.xlu0
        %v736 = vpop.trf.xlu0
        %v737 = vpop.trf.xlu0
        %738 = vst.msk [vmem:[%s497] sm:$0xff] %vm557, %v722
        %739 = vrot.lane.b32.xlu0 %v658, 119
        %v740 = vpop.permute.xlu0 %739
        %742 = vxpose.xlu0.b32.start [1/16] %v740, 128
        %743 = vxpose.xlu0.b32.cont [2/16] 0.0, 128
        %744 = vxpose.xlu0.b32.cont [3/16] 0.0, 128
        %745 = vxpose.xlu0.b32.cont [4/16] 0.0, 128
        %746 = vxpose.xlu0.b32.cont [5/16] 0.0, 128
        %747 = vxpose.xlu0.b32.cont [6/16] 0.0, 128
        %748 = vxpose.xlu0.b32.cont [7/16] 0.0, 128
        %749 = vxpose.xlu0.b32.cont [8/16] 0.0, 128
        %750 = vxpose.xlu0.b32.cont [9/16] 0.0, 128
        %751 = vxpose.xlu0.b32.cont [10/16] 0.0, 128
        %752 = vxpose.xlu0.b32.cont [11/16] 0.0, 128
        %753 = vxpose.xlu0.b32.cont [12/16] 0.0, 128
        %754 = vxpose.xlu0.b32.cont [13/16] 0.0, 128
        %755 = vxpose.xlu0.b32.cont [14/16] 0.0, 128
        %756 = vxpose.xlu0.b32.cont [15/16] 0.0, 128
        %757 = vxpose.xlu0.b32.end [16/16] 0.0, 128
        %v758 = vpop.trf.xlu0
        %v759 = vpop.trf.xlu0
        %v760 = vpop.trf.xlu0
        %v761 = vpop.trf.xlu0
        %v762 = vpop.trf.xlu0
        %v763 = vpop.trf.xlu0
        %v764 = vpop.trf.xlu0
        %v765 = vpop.trf.xlu0
        %v766 = vpop.trf.xlu0
        %v767 = vpop.trf.xlu0
        %v768 = vpop.trf.xlu0
        %v769 = vpop.trf.xlu0
        %v770 = vpop.trf.xlu0
        %v771 = vpop.trf.xlu0
        %v772 = vpop.trf.xlu0
        %v773 = vpop.trf.xlu0
        %774 = vst.msk [vmem:[%s504] sm:$0xff] %vm557, %v758
        %775 = vst.msk [vmem:[%s511] sm:$0xff] %vm636, %v633
        %v776 = vsub.f32 0.0, %v579
        %v777 = vmul.f32 %v776, 1.442695
        %v778 = vpow.pop %v777
        %v779 = vadd.f32 %v778, 1.0
        %v780 = vrcp.pop %v779
        %v781 = vmul.f32 %v779, %v780
        %v782 = vsub.f32 1.0, %v781
        %v783 = vmul.f32 %v780, %v782
        %v784 = vadd.f32 %v780, %v783
        %vm785 = vweird.f32 %v779
        %vm786 = vweird.f32 %v780
        %vm787 = vmor %vm785, %vm786
        %v788 = vsel %vm787, %v780, %v784
        %v789 = vand.u32 2147483647, %v779
        %vm790 = vcmp.eq.f32.partialorder %v789, 8.507059e+37
        %v791 = vand.u32 %v779, 2147483648
        %v792 = vor.u32 1.1754944e-38, %v791
        %v793 = vsel %vm790, %v792, %v788
        %v794 = vmul.f32 1.0, %v793
        %v795 = vmul.f32 %v579, %v794
        %797 = vrot.lane.b32.xlu0 %v795, 112
        %v798 = vpop.permute.xlu0 %797
        %800 = vst.msk [vmem:[%s518] sm:$0xff] %vm636, %v798
        %s801 = sand.u32 %s241, 1
        %s802 = scalar_lea.sflag [#allocation4], %s801
        %s803 = sand.u32 %s241, 1
        %s804 = smul.addr %s803, 8
        %s805 = scalar_lea.vmem [#allocation5], %s804
        %s806 = sand.u32 %s39, 1
        %s807 = scalar_lea.sflag [#allocation7], %s806
        %s808 = sand.u32 %s267, 1
        %s809 = smul.addr %s808, 8
        %s810 = scalar_lea.vmem [#allocation6], %s809
        %s811 = sand.u32 %s39, 1
        %s812 = scalar_lea.sflag [#allocation7], %s811
        %s813 = sand.u32 %s293, 1
        %s814 = smul.addr %s813, 8
        %s815 = scalar_lea.vmem [#allocation8], %s814
        %s816 = sand.u32 %s39, 1
        %s817 = scalar_lea.sflag [#allocation10], %s816
        %s818 = sand.u32 %s319, 1
        %s819 = smul.addr %s818, 8
        %s820 = scalar_lea.vmem [#allocation9], %s819
        %s821 = sand.u32 %s39, 1
        %s822 = scalar_lea.sflag [#allocation10], %s821
        %s823 = sand.u32 %s345, 1
        %s824 = smul.addr %s823, 8
        %s825 = scalar_lea.vmem [#allocation11], %s824
        %s826 = sand.u32 %s371, 1
        %s827 = scalar_lea.sflag [#allocation13], %s826
        %s828 = sand.u32 %s371, 1
        %s829 = smul.addr %s828, 8
        %s830 = scalar_lea.vmem [#allocation12], %s829
        // Predicated region
        $region61: #{tpu_custom_call.1} parent=55 // pred_check
          %p831 = pneg %p251
        $region62: #{tpu_custom_call.1} parent=55 // pred_check_branch
          %833 = sbr.rel (%p831) target = $region64
        $region63: #{tpu_custom_call.1} parent=55 // pred_region
          %835 = vsyncadd %s802, 0
          %s836 = smul.addr %s39, 8
          %s837 = scalar_lea.hbm %s9, %s836
          %s839 = sshll.u32 %s805, 4
          %s840 = int_to_ptr.vmem [resolvable:$true] %s839
          %s841 = sshll.u32 %s837, 4
          %s842 = int_to_ptr.hbm [resolvable:$true] %s841
          %844 = dma.vmem_to_hbm [thread:$0]  %s840, 128, %s842, %s802
        $region64: #{tpu_custom_call.1} parent=55 // pred_fallthru
          _
        // Predicated region
        $region65: #{tpu_custom_call.1} parent=55 // pred_check
          %p845 = pneg %p277
        $region66: #{tpu_custom_call.1} parent=55 // pred_check_branch
          %847 = sbr.rel (%p845) target = $region68
        $region67: #{tpu_custom_call.1} parent=55 // pred_region
          %849 = vsyncadd %s807, 0
          %s850 = smul.addr %s39, 8
          %s851 = scalar_lea.hbm %s10, %s850
          %s853 = sshll.u32 %s810, 4
          %s854 = int_to_ptr.vmem [resolvable:$true] %s853
          %s855 = sshll.u32 %s851, 4
          %s856 = int_to_ptr.hbm [resolvable:$true] %s855
          %858 = dma.vmem_to_hbm [thread:$0]  %s854, 128, %s856, %s807
        $region68: #{tpu_custom_call.1} parent=55 // pred_fallthru
          _
        // Predicated region
        $region69: #{tpu_custom_call.1} parent=55 // pred_check
          %p859 = pneg %p303
        $region70: #{tpu_custom_call.1} parent=55 // pred_check_branch
          %861 = sbr.rel (%p859) target = $region72
        $region71: #{tpu_custom_call.1} parent=55 // pred_region
          %863 = vsyncadd %s812, 0
          %s864 = smul.addr %s39, 8
          %s865 = scalar_lea.hbm %s11, %s864
          %s867 = sshll.u32 %s815, 4
          %s868 = int_to_ptr.vmem [resolvable:$true] %s867
          %s869 = sshll.u32 %s865, 4
          %s870 = int_to_ptr.hbm [resolvable:$true] %s869
          %872 = dma.vmem_to_hbm [thread:$0]  %s868, 128, %s870, %s812
        $region72: #{tpu_custom_call.1} parent=55 // pred_fallthru
          _
        // Predicated region
        $region73: #{tpu_custom_call.1} parent=55 // pred_check
          %p873 = pneg %p329
        $region74: #{tpu_custom_call.1} parent=55 // pred_check_branch
          %875 = sbr.rel (%p873) target = $region76
        $region75: #{tpu_custom_call.1} parent=55 // pred_region
          %877 = vsyncadd %s817, 0
          %s878 = smul.addr %s39, 8
          %s879 = scalar_lea.hbm %s12, %s878
          %s881 = sshll.u32 %s820, 4
          %s882 = int_to_ptr.vmem [resolvable:$true] %s881
          %s883 = sshll.u32 %s879, 4
          %s884 = int_to_ptr.hbm [resolvable:$true] %s883
          %886 = dma.vmem_to_hbm [thread:$0]  %s882, 128, %s884, %s817
        $region76: #{tpu_custom_call.1} parent=55 // pred_fallthru
          _
        // Predicated region
        $region77: #{tpu_custom_call.1} parent=55 // pred_check
          %p887 = pneg %p355
        $region78: #{tpu_custom_call.1} parent=55 // pred_check_branch
          %889 = sbr.rel (%p887) target = $region80
        $region79: #{tpu_custom_call.1} parent=55 // pred_region
          %891 = vsyncadd %s822, 0
          %s892 = smul.addr %s39, 8
          %s893 = scalar_lea.hbm %s13, %s892
          %s895 = sshll.u32 %s825, 4
          %s896 = int_to_ptr.vmem [resolvable:$true] %s895
          %s897 = sshll.u32 %s893, 4
          %s898 = int_to_ptr.hbm [resolvable:$true] %s897
          %900 = dma.vmem_to_hbm [thread:$0]  %s896, 128, %s898, %s822
        $region80: #{tpu_custom_call.1} parent=55 // pred_fallthru
          _
        // Predicated region
        $region81: #{tpu_custom_call.1} parent=55 // pred_check
          %p901 = pneg %p381
        $region82: #{tpu_custom_call.1} parent=55 // pred_check_branch
          %903 = sbr.rel (%p901) target = $region84
        $region83: #{tpu_custom_call.1} parent=55 // pred_region
          %905 = vsyncadd %s827, 0
          %s906 = smul.addr %s39, 8
          %s907 = scalar_lea.hbm %s14, %s906
          %s909 = sshll.u32 %s830, 4
          %s910 = int_to_ptr.vmem [resolvable:$true] %s909
          %s911 = sshll.u32 %s907, 4
          %s912 = int_to_ptr.hbm [resolvable:$true] %s911
          %914 = dma.vmem_to_hbm [thread:$0]  %s910, 128, %s912, %s827
        $region84: #{tpu_custom_call.1} parent=55 // pred_fallthru
          _
      $region56: #{tpu_custom_call.1} parent=5 // pred_fallthru
        _
      %p915 = scmp.le.s32.totalorder 2, %s34
      // Predicated region
      $region85: #{tpu_custom_call.1} parent=5 // pred_check
        %p916 = pneg %p915
      $region86: #{tpu_custom_call.1} parent=5 // pred_check_branch
        %918 = sbr.rel (%p916) target = $region88
      $region87: #{tpu_custom_call.1} parent=5 // pred_region
        %s919 = ssub.s32 %s34, 2
        // Predicated region
        $region89: #{tpu_custom_call.1} parent=87 // pred_check
          %p920 = pneg %p257
        $region90: #{tpu_custom_call.1} parent=87 // pred_check_branch
          %922 = sbr.rel (%p920) target = $region92
        $region91: #{tpu_custom_call.1} parent=87 // pred_region
          %s923 = sand.u32 %s242, 1
          %s924 = scalar_lea.sflag [#allocation4], %s923
          %s925 = sand.u32 %s242, 1
          %s926 = smul.addr %s925, 8
          %s927 = scalar_lea.vmem [#allocation5], %s926
          %929 = dma.done %s924, 128
        $region92: #{tpu_custom_call.1} parent=87 // pred_fallthru
          _
        // Predicated region
        $region93: #{tpu_custom_call.1} parent=87 // pred_check
          %p930 = pneg %p283
        $region94: #{tpu_custom_call.1} parent=87 // pred_check_branch
          %932 = sbr.rel (%p930) target = $region96
        $region95: #{tpu_custom_call.1} parent=87 // pred_region
          %s933 = sand.u32 %s40, 1
          %s934 = scalar_lea.sflag [#allocation7], %s933
          %s935 = sand.u32 %s268, 1
          %s936 = smul.addr %s935, 8
          %s937 = scalar_lea.vmem [#allocation6], %s936
          %939 = dma.done %s934, 128
        $region96: #{tpu_custom_call.1} parent=87 // pred_fallthru
          _
        // Predicated region
        $region97: #{tpu_custom_call.1} parent=87 // pred_check
          %p940 = pneg %p309
        $region98: #{tpu_custom_call.1} parent=87 // pred_check_branch
          %942 = sbr.rel (%p940) target = $region100
        $region99: #{tpu_custom_call.1} parent=87 // pred_region
          %s943 = sand.u32 %s40, 1
          %s944 = scalar_lea.sflag [#allocation7], %s943
          %s945 = sand.u32 %s294, 1
          %s946 = smul.addr %s945, 8
          %s947 = scalar_lea.vmem [#allocation8], %s946
          %949 = dma.done %s944, 128
        $region100: #{tpu_custom_call.1} parent=87 // pred_fallthru
          _
        // Predicated region
        $region101: #{tpu_custom_call.1} parent=87 // pred_check
          %p950 = pneg %p335
        $region102: #{tpu_custom_call.1} parent=87 // pred_check_branch
          %952 = sbr.rel (%p950) target = $region104
        $region103: #{tpu_custom_call.1} parent=87 // pred_region
          %s953 = sand.u32 %s40, 1
          %s954 = scalar_lea.sflag [#allocation10], %s953
          %s955 = sand.u32 %s320, 1
          %s956 = smul.addr %s955, 8
          %s957 = scalar_lea.vmem [#allocation9], %s956
          %959 = dma.done %s954, 128
        $region104: #{tpu_custom_call.1} parent=87 // pred_fallthru
          _
        // Predicated region
        $region105: #{tpu_custom_call.1} parent=87 // pred_check
          %p960 = pneg %p361
        $region106: #{tpu_custom_call.1} parent=87 // pred_check_branch
          %962 = sbr.rel (%p960) target = $region108
        $region107: #{tpu_custom_call.1} parent=87 // pred_region
          %s963 = sand.u32 %s40, 1
          %s964 = scalar_lea.sflag [#allocation10], %s963
          %s965 = sand.u32 %s346, 1
          %s966 = smul.addr %s965, 8
          %s967 = scalar_lea.vmem [#allocation11], %s966
          %969 = dma.done %s964, 128
        $region108: #{tpu_custom_call.1} parent=87 // pred_fallthru
          _
        // Predicated region
        $region109: #{tpu_custom_call.1} parent=87 // pred_check
          %p970 = pneg %p387
        $region110: #{tpu_custom_call.1} parent=87 // pred_check_branch
          %972 = sbr.rel (%p970) target = $region112
        $region111: #{tpu_custom_call.1} parent=87 // pred_region
          %s973 = sand.u32 %s372, 1
          %s974 = scalar_lea.sflag [#allocation13], %s973
          %s975 = sand.u32 %s372, 1
          %s976 = smul.addr %s975, 8
          %s977 = scalar_lea.vmem [#allocation12], %s976
          %979 = dma.done %s974, 128
        $region112: #{tpu_custom_call.1} parent=87 // pred_fallthru
          _
      $region88: #{tpu_custom_call.1} parent=5 // pred_fallthru
        _
    $region6: #{tpu_custom_call.1} parent=1 // loop_footer
      %s38 = sadd.s32 1, %s34
    $region7: #{tpu_custom_call.1} parent=1 // loop_footer_branch
      %33 = sbr.rel target = $region3
    $region8: #{tpu_custom_call.1} parent=1 // loop_exit
      _
    %980 = vsyncpa [#allocation3], 1
    %s981 = scalar_lea.sflag [#allocation3], 1
    %982 = vsyncpa %s981, 1
    %983 = vsyncpa [#allocation4], 1
    %s984 = scalar_lea.sflag [#allocation4], 1
    %985 = vsyncpa %s984, 1
    %986 = vsyncpa [#allocation7], 1
    %s987 = scalar_lea.sflag [#allocation7], 1
    %988 = vsyncpa %s987, 1
    %989 = vsyncpa [#allocation10], 1
    %s990 = scalar_lea.sflag [#allocation10], 1
    %991 = vsyncpa %s990, 1
    %992 = vsyncpa [#allocation13], 1
    %s993 = scalar_lea.sflag [#allocation13], 1
    %994 = vsyncpa %s993, 1

</llo_original>
